<compile_context>
chip_gen: v6e
topology: v6e:2x2x1
jax: 0.10.0
libtpu: 0.0.40
codegen_flags: <defaults>
</compile_context>

<pallas_src>
import jax
import jax.numpy as jnp
from jax.experimental import pallas as pl
from jax.experimental.pallas import tpu as pltpu


def _round_up(n, m):
    return ((n + m - 1) // m) * m


def policy_mlp_kernel(x_ref, w1_ref, b1_ref, w2_ref, b2_ref, wd_ref, bd_ref,
                      out_ref):
    x = x_ref[...]                                   # (TB, 4)   f32
    w1 = w1_ref[...]                                 # (4, 128)  f32

    # ---- Layer 1 on the VPU: 4 broadcast multiply-adds (K=4 is MXU-hostile).
    acc = x[:, 0:1] * w1[0:1, :]                     # (TB,1)*(1,128) -> (TB,128)
    for i in range(1, 4):
        acc = acc + x[:, i:i + 1] * w1[i:i + 1, :]
    h1 = jnp.maximum(acc + b1_ref[...], 0.0)         # (TB, 128) f32

    # ---- Layer 2 on the MXU: bf16 operands, f32 accumulation.
    h2 = jnp.dot(h1.astype(jnp.bfloat16), w2_ref[...],
                 preferred_element_type=jnp.float32)
    h2 = jnp.maximum(h2 + b2_ref[...], 0.0)          # (TB, 128) f32

    # ---- Layer 3 + 2-class softmax folded into a sigmoid of the logit diff.
    # d = (h2 @ w3[:,1] + b3[1]) - (h2 @ w3[:,0] + b3[0]) = h2 @ wd + bd
    d = jnp.sum(h2 * wd_ref[...], axis=-1, keepdims=True) + bd_ref[...]  # (TB,1)
    p1 = pl.reciprocal(1.0 + jnp.exp(-d), approx=True)   # sigmoid(l1 - l0), EUP
    p0 = 1.0 - p1
    out_ref[:, 0:1] = p0
    out_ref[:, 1:2] = p1


def policy_forward(x, params):
    """x: (B, 4) float32.  Returns softmax probabilities (B, 2)."""
    w1, b1, w2, b2, w3, b3 = params
    B = x.shape[0]

    # Fold the final layer: only the logit difference is needed post-sigmoid.
    wd = (w3[:, 1] - w3[:, 0]).reshape(1, 128)       # (1, 128)
    bd = (b3[:, 1] - b3[:, 0]).reshape(1, 1)         # (1, 1)
    # bf16 MXU operands for the 128x128 matmul (cast once, outside the kernel).
    w2_bf = w2.astype(jnp.bfloat16)

    # Batch tiling: one big tile for small B, 512-row tiles for large rollouts.
    TB = min(512, _round_up(B, 8))
    B_pad = _round_up(B, TB)
    if B_pad != B:
        x = jnp.pad(x, ((0, B_pad - B), (0, 0)))
    grid = (B_pad // TB,)

    def resident(arr):
        return pl.BlockSpec(arr.shape, lambda i: (0,) * arr.ndim)

    in_specs = [
        pl.BlockSpec((TB, 4), lambda i: (i, 0)),     # x: tiled over batch
        resident(w1), resident(b1),
        resident(w2_bf), resident(b2),
        resident(wd), resident(bd),
    ]
    out_spec = pl.BlockSpec((TB, 2), lambda i: (i, 0))

    out = pl.pallas_call(
        policy_mlp_kernel,
        out_shape=jax.ShapeDtypeStruct((B_pad, 2), jnp.float32),
        grid=grid,
        in_specs=in_specs,
        out_specs=out_spec,
        compiler_params=pltpu.CompilerParams(
            dimension_semantics=("parallel",)),
    )(x, w1, b1, w2_bf, b2, wd, bd)
    return out[:B]


def init_params(key):
    """Deterministic init mimicking nn.Linear shapes (weights stored [in, out])."""
    k1, k2, k3, k4, k5, k6 = jax.random.split(key, 6)

    def linear(kw, kb, fan_in, fan_out):
        bound = 1.0 / jnp.sqrt(fan_in)
        w = jax.random.uniform(kw, (fan_in, fan_out), jnp.float32, -bound, bound)
        b = jax.random.uniform(kb, (1, fan_out), jnp.float32, -bound, bound)
        return w, b

    w1, b1 = linear(k1, k2, 4, 128)
    w2, b2 = linear(k3, k4, 128, 128)
    w3, b3 = linear(k5, k6, 128, 2)
    return (w1, b1, w2, b2, w3, b3)


def policy_forward_ref(x, params):
    """Pure-JAX f32 reference for correctness checking."""
    w1, b1, w2, b2, w3, b3 = params
    h1 = jnp.maximum(x @ w1 + b1, 0.0)
    h2 = jnp.maximum(h1 @ w2 + b2, 0.0)
    logits = h2 @ w3 + b3
    return jax.nn.softmax(logits, axis=1)


if __name__ == "__main__":
    key = jax.random.PRNGKey(0)
    kx, kp = jax.random.split(key)

    B = 8                                   # small batch of CartPole-like states
    x = jax.random.normal(kx, (B, 4), dtype=jnp.float32)
    params = init_params(kp)

    # jit the wrapper so launch + weight-prep overhead is amortized per call.
    fwd = jax.jit(policy_forward)
    probs = fwd(x, params)
    probs = jax.block_until_ready(probs)

    ref = policy_forward_ref(x, params)
    assert probs.shape == (B, 2)
    # p0 = 1 - p1 exactly, so rows sum to 1 up to a ulp.
    assert jnp.allclose(jnp.sum(probs, axis=1), 1.0, atol=1e-5)
    # bf16 MXU operands + approx reciprocal -> compare at a relaxed tolerance.
    assert jnp.allclose(probs, ref, atol=2e-2, rtol=2e-2)

    print("KERNEL_OK")
</pallas_src>

<mosaic_0001>
module attributes {stable_mosaic.version = 11 : i64} {
  func.func @policy_mlp_kernel(%arg0: i32, %arg1: memref<8x4xf32, #tpu.memory_space<vmem>>, %arg2: memref<4x128xf32, #tpu.memory_space<vmem>>, %arg3: memref<1x128xf32, #tpu.memory_space<vmem>>, %arg4: memref<128x128xbf16, #tpu.memory_space<vmem>>, %arg5: memref<1x128xf32, #tpu.memory_space<vmem>>, %arg6: memref<1x128xf32, #tpu.memory_space<vmem>>, %arg7: memref<1x1xf32, #tpu.memory_space<vmem>>, %arg8: memref<8x2xf32, #tpu.memory_space<vmem>>) attributes {dimension_semantics = [#tpu.dimension_semantics<parallel>], iteration_bounds = array<i64: 1>, scalar_prefetch = 0 : i64, scratch_operands = 0 : i64, tpu.core_type = #tpu.core_type<tc>, window_params = [{transform_indices = @transform_0, window_bounds = array<i64: 8, 4>}, {pipeline_mode = #tpu.pipeline_mode<synchronous>, transform_indices = @transform_1, window_bounds = array<i64: 4, 128>}, {pipeline_mode = #tpu.pipeline_mode<synchronous>, transform_indices = @transform_2, window_bounds = array<i64: 1, 128>}, {pipeline_mode = #tpu.pipeline_mode<synchronous>, transform_indices = @transform_3, window_bounds = array<i64: 128, 128>}, {pipeline_mode = #tpu.pipeline_mode<synchronous>, transform_indices = @transform_4, window_bounds = array<i64: 1, 128>}, {pipeline_mode = #tpu.pipeline_mode<synchronous>, transform_indices = @transform_5, window_bounds = array<i64: 1, 128>}, {pipeline_mode = #tpu.pipeline_mode<synchronous>, transform_indices = @transform_6, window_bounds = array<i64: 1, 1>}, {transform_indices = @transform_7, window_bounds = array<i64: 8, 2>}]} {
    %c0 = arith.constant 0 : index
    %c0_0 = arith.constant 0 : index
    %0 = vector.load %arg1[%c0, %c0_0] : memref<8x4xf32, #tpu.memory_space<vmem>>, vector<8x4xf32>
    %c0_1 = arith.constant 0 : index
    %c0_2 = arith.constant 0 : index
    %1 = vector.load %arg2[%c0_1, %c0_2] : memref<4x128xf32, #tpu.memory_space<vmem>>, vector<4x128xf32>
    %2 = vector.extract_strided_slice %0 {offsets = [0, 0], sizes = [8, 1], strides = [1, 1]} : vector<8x4xf32> to vector<8x1xf32>
    %3 = vector.extract_strided_slice %1 {offsets = [0, 0], sizes = [1, 128], strides = [1, 1]} : vector<4x128xf32> to vector<1x128xf32>
    %4 = vector.broadcast %2 : vector<8x1xf32> to vector<8x128xf32>
    %5 = vector.broadcast %3 : vector<1x128xf32> to vector<8x128xf32>
    %6 = arith.mulf %4, %5 : vector<8x128xf32>
    %7 = vector.extract_strided_slice %0 {offsets = [0, 1], sizes = [8, 1], strides = [1, 1]} : vector<8x4xf32> to vector<8x1xf32>
    %8 = vector.extract_strided_slice %1 {offsets = [1, 0], sizes = [1, 128], strides = [1, 1]} : vector<4x128xf32> to vector<1x128xf32>
    %9 = vector.broadcast %7 : vector<8x1xf32> to vector<8x128xf32>
    %10 = vector.broadcast %8 : vector<1x128xf32> to vector<8x128xf32>
    %11 = arith.mulf %9, %10 : vector<8x128xf32>
    %12 = arith.addf %6, %11 : vector<8x128xf32>
    %13 = vector.extract_strided_slice %0 {offsets = [0, 2], sizes = [8, 1], strides = [1, 1]} : vector<8x4xf32> to vector<8x1xf32>
    %14 = vector.extract_strided_slice %1 {offsets = [2, 0], sizes = [1, 128], strides = [1, 1]} : vector<4x128xf32> to vector<1x128xf32>
    %15 = vector.broadcast %13 : vector<8x1xf32> to vector<8x128xf32>
    %16 = vector.broadcast %14 : vector<1x128xf32> to vector<8x128xf32>
    %17 = arith.mulf %15, %16 : vector<8x128xf32>
    %18 = arith.addf %12, %17 : vector<8x128xf32>
    %19 = vector.extract_strided_slice %0 {offsets = [0, 3], sizes = [8, 1], strides = [1, 1]} : vector<8x4xf32> to vector<8x1xf32>
    %20 = vector.extract_strided_slice %1 {offsets = [3, 0], sizes = [1, 128], strides = [1, 1]} : vector<4x128xf32> to vector<1x128xf32>
    %21 = vector.broadcast %19 : vector<8x1xf32> to vector<8x128xf32>
    %22 = vector.broadcast %20 : vector<1x128xf32> to vector<8x128xf32>
    %23 = arith.mulf %21, %22 : vector<8x128xf32>
    %24 = arith.addf %18, %23 : vector<8x128xf32>
    %c0_3 = arith.constant 0 : index
    %c0_4 = arith.constant 0 : index
    %25 = vector.load %arg3[%c0_3, %c0_4] : memref<1x128xf32, #tpu.memory_space<vmem>>, vector<1x128xf32>
    %26 = vector.broadcast %25 : vector<1x128xf32> to vector<8x128xf32>
    %27 = arith.addf %24, %26 : vector<8x128xf32>
    %cst = arith.constant 0.000000e+00 : f32
    %28 = vector.broadcast %cst : f32 to vector<8x128xf32>
    %29 = arith.maximumf %27, %28 : vector<8x128xf32>
    %30 = arith.truncf %29 : vector<8x128xf32> to vector<8x128xbf16>
    %c0_5 = arith.constant 0 : index
    %c0_6 = arith.constant 0 : index
    %31 = vector.load %arg4[%c0_5, %c0_6] : memref<128x128xbf16, #tpu.memory_space<vmem>>, vector<128x128xbf16>
    %cst_7 = arith.constant dense<0.000000e+00> : vector<8x128xf32>
    %32 = tpu.matmul %30, %31, %cst_7 {dimension_numbers = #tpu.dot_dimension_numbers<[1], [0], [0], [1], [0, 0, 1, 1], [], []>} : vector<8x128xbf16>, vector<128x128xbf16>, vector<8x128xf32> -> vector<8x128xf32>
    %c0_8 = arith.constant 0 : index
    %c0_9 = arith.constant 0 : index
    %33 = vector.load %arg5[%c0_8, %c0_9] : memref<1x128xf32, #tpu.memory_space<vmem>>, vector<1x128xf32>
    %34 = vector.broadcast %33 : vector<1x128xf32> to vector<8x128xf32>
    %35 = arith.addf %32, %34 : vector<8x128xf32>
    %cst_10 = arith.constant 0.000000e+00 : f32
    %36 = vector.broadcast %cst_10 : f32 to vector<8x128xf32>
    %37 = arith.maximumf %35, %36 : vector<8x128xf32>
    %c0_11 = arith.constant 0 : index
    %c0_12 = arith.constant 0 : index
    %38 = vector.load %arg6[%c0_11, %c0_12] : memref<1x128xf32, #tpu.memory_space<vmem>>, vector<1x128xf32>
    %39 = vector.broadcast %38 : vector<1x128xf32> to vector<8x128xf32>
    %40 = arith.mulf %37, %39 : vector<8x128xf32>
    %cst_13 = arith.constant dense<0.000000e+00> : vector<8xf32>
    %41 = vector.multi_reduction <add>, %40, %cst_13 [1] : vector<8x128xf32> to vector<8xf32>
    %42 = vector.shape_cast %41 : vector<8xf32> to vector<8x1xf32>
    %c0_14 = arith.constant 0 : index
    %c0_15 = arith.constant 0 : index
    %43 = vector.load %arg7[%c0_14, %c0_15] : memref<1x1xf32, #tpu.memory_space<vmem>>, vector<1x1xf32>
    %44 = vector.broadcast %43 : vector<1x1xf32> to vector<8x1xf32>
    %45 = arith.addf %42, %44 : vector<8x1xf32>
    %cst_16 = arith.constant 0.000000e+00 : f32
    %46 = vector.broadcast %cst_16 : f32 to vector<8x1xf32>
    %47 = arith.subf %46, %45 : vector<8x1xf32>
    %48 = math.exp %47 : vector<8x1xf32>
    %cst_17 = arith.constant 1.000000e+00 : f32
    %49 = vector.broadcast %cst_17 : f32 to vector<8x1xf32>
    %50 = arith.addf %49, %48 : vector<8x1xf32>
    %51 = tpu.reciprocal %50 {approx = true} : vector<8x1xf32> -> vector<8x1xf32>
    %cst_18 = arith.constant 1.000000e+00 : f32
    %52 = vector.broadcast %cst_18 : f32 to vector<8x1xf32>
    %53 = arith.subf %52, %51 : vector<8x1xf32>
    %c0_19 = arith.constant 0 : index
    %c0_20 = arith.constant 0 : index
    %54 = vector.load %arg8[%c0_19, %c0_20] : memref<8x2xf32, #tpu.memory_space<vmem>>, vector<8x1xf32>
    tpu.vector_store %arg8[%c0_19, %c0_20], %53 {strides = array<i32>} : memref<8x2xf32, #tpu.memory_space<vmem>>, vector<8x1xf32>,
    %c0_21 = arith.constant 0 : index
    %c1 = arith.constant 1 : index
    %55 = vector.load %arg8[%c0_21, %c1] : memref<8x2xf32, #tpu.memory_space<vmem>>, vector<8x1xf32>
    tpu.vector_store %arg8[%c0_21, %c1], %51 {strides = array<i32>} : memref<8x2xf32, #tpu.memory_space<vmem>>, vector<8x1xf32>,
    return
  }
  func.func @transform_0(%arg0: i32) -> (i32, i32) {
    %c0_i32 = arith.constant 0 : i32
    %c0_i32_0 = arith.constant 0 : i32
    return %arg0, %c0_i32 : i32, i32
  }
  func.func @transform_1(%arg0: i32) -> (i32, i32) {
    %c0_i32 = arith.constant 0 : i32
    %c0_i32_0 = arith.constant 0 : i32
    %c0_i32_1 = arith.constant 0 : i32
    return %c0_i32, %c0_i32_0 : i32, i32
  }
  func.func @transform_2(%arg0: i32) -> (i32, i32) {
    %c0_i32 = arith.constant 0 : i32
    %c0_i32_0 = arith.constant 0 : i32
    %c0_i32_1 = arith.constant 0 : i32
    return %c0_i32, %c0_i32_0 : i32, i32
  }
  func.func @transform_3(%arg0: i32) -> (i32, i32) {
    %c0_i32 = arith.constant 0 : i32
    %c0_i32_0 = arith.constant 0 : i32
    %c0_i32_1 = arith.constant 0 : i32
    return %c0_i32, %c0_i32_0 : i32, i32
  }
  func.func @transform_4(%arg0: i32) -> (i32, i32) {
    %c0_i32 = arith.constant 0 : i32
    %c0_i32_0 = arith.constant 0 : i32
    %c0_i32_1 = arith.constant 0 : i32
    return %c0_i32, %c0_i32_0 : i32, i32
  }
  func.func @transform_5(%arg0: i32) -> (i32, i32) {
    %c0_i32 = arith.constant 0 : i32
    %c0_i32_0 = arith.constant 0 : i32
    %c0_i32_1 = arith.constant 0 : i32
    return %c0_i32, %c0_i32_0 : i32, i32
  }
  func.func @transform_6(%arg0: i32) -> (i32, i32) {
    %c0_i32 = arith.constant 0 : i32
    %c0_i32_0 = arith.constant 0 : i32
    %c0_i32_1 = arith.constant 0 : i32
    return %c0_i32, %c0_i32_0 : i32, i32
  }
  func.func @transform_7(%arg0: i32) -> (i32, i32) {
    %c0_i32 = arith.constant 0 : i32
    %c0_i32_0 = arith.constant 0 : i32
    return %arg0, %c0_i32 : i32, i32
  }
}

</mosaic_0001>

<llo_original>
// kernel: policy_forward.1
$region0: #{policy_forward.1}
  #allocation0 [shape = 'u32[]', space=smem, size = 0x4, offset = 0x4, fixed_abs, tag = 'smem constant byte address 0x4 - core index']
  #allocation1 [shape = 'u32[144,128]{1,0:T(1,128)}', space=vmem, size = 0x12000, scoped, tag = 'internal scratch']
  #allocation2 [shape = 'f32[1,1]{1,0:T(1,128)S(1)}', space=vmem, size = 0x200, scoped, tag = 'scoped memory for policy_forward.1']
  %s0 = inlined_call_operand.vmem [shape: f32[8,4], index: 0, kind: input, shape index: {}]
  %s1 = inlined_call_operand.vmem [shape: f32[4,128], index: 1, kind: input, shape index: {}]
  %s2 = inlined_call_operand.vmem [shape: f32[1,128], index: 2, kind: input, shape index: {}]
  %s3 = inlined_call_operand.vmem [shape: bf16[128,128], index: 3, kind: input, shape index: {}]
  %s4 = inlined_call_operand.vmem [shape: f32[1,128], index: 4, kind: input, shape index: {}]
  %s5 = inlined_call_operand.vmem [shape: f32[1,128], index: 5, kind: input, shape index: {}]
  %s6 = inlined_call_operand.<no memory space> [shape: f32[1,1], index: 6, kind: input, shape index: {}]
  %s7 = inlined_call_operand.vmem [shape: f32[8,2], index: 7, kind: output, shape index: {}]
  %s8 = sld [smem:[#allocation0]]
  $region38: #{policy_forward.1} parent=0
    _
  %s10 = ssub.s32 1, %s8
  %s11 = scalar_select 0, %s10, %s8
  %v12 = vstv %s6
  %13 = vst [vmem:[#allocation2] sm:$0x1] %v12
  // Predicated region
  $region2: #{policy_forward.1} parent=0 // pred_check
    _
  $region3: #{policy_forward.1} parent=0 // pred_check_branch
    %15 = sbr.rel (0) target = $region5
  $region4: #{policy_forward.1} parent=0 // pred_region
    _
  $region5: #{policy_forward.1} parent=0 // pred_fallthru
    _
  // Predicated region
  $region6: #{policy_forward.1} parent=0 // pred_check
    _
  $region7: #{policy_forward.1} parent=0 // pred_check_branch
    %17 = sbr.rel (0) target = $region9
  $region8: #{policy_forward.1} parent=0 // pred_region
    _
  $region9: #{policy_forward.1} parent=0 // pred_fallthru
    _
  // Predicated region
  $region10: #{policy_forward.1} parent=0 // pred_check
    _
  $region11: #{policy_forward.1} parent=0 // pred_check_branch
    %19 = sbr.rel (0) target = $region13
  $region12: #{policy_forward.1} parent=0 // pred_region
    _
  $region13: #{policy_forward.1} parent=0 // pred_fallthru
    _
  // Predicated region
  $region14: #{policy_forward.1} parent=0 // pred_check
    _
  $region15: #{policy_forward.1} parent=0 // pred_check_branch
    %21 = sbr.rel (0) target = $region17
  $region16: #{policy_forward.1} parent=0 // pred_region
    _
  $region17: #{policy_forward.1} parent=0 // pred_fallthru
    _
  // Predicated region
  $region18: #{policy_forward.1} parent=0 // pred_check
    _
  $region19: #{policy_forward.1} parent=0 // pred_check_branch
    %23 = sbr.rel (0) target = $region21
  $region20: #{policy_forward.1} parent=0 // pred_region
    _
  $region21: #{policy_forward.1} parent=0 // pred_fallthru
    _
  // Predicated region
  $region22: #{policy_forward.1} parent=0 // pred_check
    _
  $region23: #{policy_forward.1} parent=0 // pred_check_branch
    %25 = sbr.rel (0) target = $region25
  $region24: #{policy_forward.1} parent=0 // pred_region
    _
  $region25: #{policy_forward.1} parent=0 // pred_fallthru
    _
  // Predicated region
  $region26: #{policy_forward.1} parent=0 // pred_check
    _
  $region27: #{policy_forward.1} parent=0 // pred_check_branch
    %27 = sbr.rel (0) target = $region29
  $region28: #{policy_forward.1} parent=0 // pred_region
    _
  $region29: #{policy_forward.1} parent=0 // pred_fallthru
    _
  %v29 = vld [vmem:[%s0] sm:$0xff]
  %v30 = vld [vmem:[%s1] sm:$0xf]
  %32 = vset.pattern.permute.xlu0 0
  %33 = vperm.xlu0 %32, %v29
  %v34 = vpop.permute.xlu0 %33
  %v36 = vlaneseq
  %v37 = vshrl.u32 %v36, 7
  %v38 = vsub.s32 0, %v37
  %v39 = vrot.slane %v30, %v38
  %v40 = vmul.f32 %v34, %v39
  %41 = vset.pattern.permute.xlu0 1
  %42 = vperm.xlu0 %41, %v29
  %v43 = vpop.permute.xlu0 %42
  %v45 = vlaneseq
  %v46 = vshrl.u32 %v45, 7
  %v47 = vsub.s32 1, %v46
  %v48 = vrot.slane %v30, %v47
  %v49 = vmul.f32 %v43, %v48
  %v50 = vadd.f32 %v40, %v49
  %51 = vset.pattern.permute.xlu0 2
  %52 = vperm.xlu0 %51, %v29
  %v53 = vpop.permute.xlu0 %52
  %v55 = vlaneseq
  %v56 = vshrl.u32 %v55, 7
  %v57 = vsub.s32 2, %v56
  %v58 = vrot.slane %v30, %v57
  %v59 = vmul.f32 %v53, %v58
  %v60 = vadd.f32 %v50, %v59
  %61 = vset.pattern.permute.xlu0 3
  %62 = vperm.xlu0 %61, %v29
  %v63 = vpop.permute.xlu0 %62
  %v65 = vlaneseq
  %v66 = vshrl.u32 %v65, 7
  %v67 = vsub.s32 3, %v66
  %v68 = vrot.slane %v30, %v67
  %v69 = vmul.f32 %v63, %v68
  %v70 = vadd.f32 %v60, %v69
  %v71 = vld [vmem:[%s2] sm:$0x1]
  %v73 = vlaneseq
  %v74 = vshrl.u32 %v73, 7
  %v75 = vsub.s32 0, %v74
  %v76 = vrot.slane %v71, %v75
  %v78 = vadd.f32 %v70, %v76
  %v79 = vmax.f32 %v78, 0.0
  %v80 = vpack.c.bf16 %v79, %v79
  %v81 = vld [vmem:[%s3] sm:$0xf]
  %v82 = vld [vmem:[%s3 + $0x4] sm:$0xf]
  %v83 = vld [vmem:[%s3 + $0x8] sm:$0xf]
  %v84 = vld [vmem:[%s3 + $0xc] sm:$0xf]
  %v85 = vld [vmem:[%s3 + $0x10] sm:$0xf]
  %v86 = vld [vmem:[%s3 + $0x14] sm:$0xf]
  %v87 = vld [vmem:[%s3 + $0x18] sm:$0xf]
  %v88 = vld [vmem:[%s3 + $0x1c] sm:$0xf]
  %v89 = vld [vmem:[%s3 + $0x20] sm:$0xf]
  %v90 = vld [vmem:[%s3 + $0x24] sm:$0xf]
  %v91 = vld [vmem:[%s3 + $0x28] sm:$0xf]
  %v92 = vld [vmem:[%s3 + $0x2c] sm:$0xf]
  %v93 = vld [vmem:[%s3 + $0x30] sm:$0xf]
  %v94 = vld [vmem:[%s3 + $0x34] sm:$0xf]
  %v95 = vld [vmem:[%s3 + $0x38] sm:$0xf]
  %v96 = vld [vmem:[%s3 + $0x3c] sm:$0xf]
  %v97 = vld [vmem:[%s4] sm:$0x1]
  %v99 = vlaneseq
  %v100 = vshrl.u32 %v99, 7
  %v101 = vsub.s32 0, %v100
  %v102 = vrot.slane %v97, %v101
  %v120 = vunpack.c.l.b16 %v81
  %v121 = vunpack.c.l.b16 %v82
  %v122 = vunpack.c.l.b16 %v83
  %v123 = vunpack.c.l.b16 %v84
  %v124 = vunpack.c.l.b16 %v85
  %v125 = vunpack.c.l.b16 %v86
  %v126 = vunpack.c.l.b16 %v87
  %v127 = vunpack.c.l.b16 %v88
  %v128 = vunpack.c.l.b16 %v89
  %v129 = vunpack.c.l.b16 %v90
  %v130 = vunpack.c.l.b16 %v91
  %v131 = vunpack.c.l.b16 %v92
  %v132 = vunpack.c.l.b16 %v93
  %v133 = vunpack.c.l.b16 %v94
  %v134 = vunpack.c.l.b16 %v95
  %v135 = vunpack.c.l.b16 %v96
  %v136 = vpack.c.b16 %v121, %v120
  %v137 = vpack.c.b16 %v123, %v122
  %v138 = vpack.c.b16 %v125, %v124
  %v139 = vpack.c.b16 %v127, %v126
  %v140 = vpack.c.b16 %v129, %v128
  %v141 = vpack.c.b16 %v131, %v130
  %v142 = vpack.c.b16 %v133, %v132
  %v143 = vpack.c.b16 %v135, %v134
  %152 = vmatprep.subr.bf16.mxu0 0
  %153 = vmatpush1.bf16.msra.mxu0 %v143
  %154 = vmatprep.subr.bf16.mxu0 0
  %155 = vmatpush1.bf16.msra.mxu0 %v142
  %156 = vmatprep.subr.bf16.mxu0 0
  %157 = vmatpush1.bf16.msra.mxu0 %v141
  %158 = vmatprep.subr.bf16.mxu0 0
  %159 = vmatpush1.bf16.msra.mxu0 %v140
  %160 = vmatprep.subr.bf16.mxu0 0
  %161 = vmatpush1.bf16.msra.mxu0 %v139
  %162 = vmatprep.subr.bf16.mxu0 0
  %163 = vmatpush1.bf16.msra.mxu0 %v138
  %164 = vmatprep.subr.bf16.mxu0 0
  %165 = vmatpush1.bf16.msra.mxu0 %v137
  %166 = vmatprep.subr.bf16.mxu0 0
  %167 = vmatpush1.bf16.msra.mxu0 %v136
  %168 = vmatprep.subr.bf16.mxu0 0
  %169 = vmatpush2.bf16.msra.mxu0 0
  %170 = vmatprep.subr.bf16.mxu0 0
  %171 = vmatpush2.bf16.msra.mxu0 0
  %172 = vmatprep.subr.bf16.mxu0 0
  %173 = vmatpush2.bf16.msra.mxu0 0
  %174 = vmatprep.subr.bf16.mxu0 0
  %175 = vmatpush2.bf16.msra.mxu0 0
  %176 = vmatprep.subr.bf16.mxu0 0
  %177 = vmatpush2.bf16.msra.mxu0 0
  %178 = vmatprep.subr.bf16.mxu0 0
  %179 = vmatpush2.bf16.msra.mxu0 0
  %180 = vmatprep.subr.bf16.mxu0 0
  %181 = vmatpush2.bf16.msra.mxu0 0
  %182 = vmatprep.subr.bf16.mxu0 0
  %183 = vmatpush2.bf16.msra.mxu0 0
  %184 = vmatprep.mubr.bf16.mxu0 0
  %185 = vmatmul.mubr.bf16.gmra.mxu0 %v80
  %v186 = vpop.f32.mrf.mxu0
  %v187 = vadd.f32 %v102, %v186
  %v188 = vpop.f32.mrf.mxu0
  %v189 = vpop.f32.mrf.mxu0
  %v190 = vpop.f32.mrf.mxu0
  %191 = vdwg.mxu0
  %v192 = vmax.f32 %v187, 0.0
  %v193 = vld [vmem:[%s5] sm:$0x1]
  %v195 = vlaneseq
  %v196 = vshrl.u32 %v195, 7
  %v197 = vsub.s32 0, %v196
  %v198 = vrot.slane %v193, %v197
  %v200 = vmul.f32 %v192, %v198
  %201 = vadd.xlane.f32.xlu0 %v200
  %v202 = vpop.xlane.xlu0 %201
  %v203 = vld [vmem:[#allocation2] sm:$0x1]
  %v205 = vlaneseq
  %v206 = vshrl.u32 %v205, 7
  %v207 = vsub.s32 0, %v206
  %v208 = vrot.slane %v203, %v207
  %v210 = vadd.f32 %v202, %v208
  %v211 = vsub.f32 0.0, %v210
  %v212 = vmul.f32 %v211, 1.442695
  %v213 = vpow.pop %v212
  %v214 = vadd.f32 %v213, 1.0
  %v215 = vrcp.pop %v214
  %v216 = vsub.f32 1.0, %v215
  %vm217 = vcmask 7168
  %218 = vst.msk [vmem:[%s7] sm:$0xff] %vm217, %v216
  %220 = vrot.lane.b32.xlu0 %v215, 1
  %v221 = vpop.permute.xlu0 %220
  %vm223 = vcmask 15368
  %224 = vst.msk [vmem:[%s7] sm:$0xff] %vm223, %v221
  // Predicated region
  $region30: #{policy_forward.1} parent=0 // pred_check
    _
  $region31: #{policy_forward.1} parent=0 // pred_check_branch
    %226 = sbr.rel (0) target = $region33
  $region32: #{policy_forward.1} parent=0 // pred_region
    _
  $region33: #{policy_forward.1} parent=0 // pred_fallthru
    _
  // Predicated region
  $region34: #{policy_forward.1} parent=0 // pred_check
    _
  $region35: #{policy_forward.1} parent=0 // pred_check_branch
    %228 = sbr.rel (0) target = $region37
  $region36: #{policy_forward.1} parent=0 // pred_region
    _
  $region37: #{policy_forward.1} parent=0 // pred_fallthru
    _

</llo_original>
